<compile_context>
chip_gen: v6e
topology: v6e:2x2x1
jax: 0.10.0
libtpu: 0.0.40
codegen_flags: <defaults>
</compile_context>

<pallas_src>
import jax
import jax.numpy as jnp
from jax.experimental import pallas as pl
from jax.experimental.pallas import tpu as pltpu

LANE = 128
SUBLANE = 8


def _round_up(n, m):
    return ((n + m - 1) // m) * m


def actor_kernel(x_ref, w1_ref, b1_ref, w2_ref, b2_ref, w3_ref, b3_ref, o_ref):
    # fc1 + tanh  (tanh lowers to the EUP, a separate issue slot from VPU/MXU)
    h1 = jnp.tanh(
        jnp.dot(x_ref[...], w1_ref[...], preferred_element_type=jnp.float32)
        + b1_ref[...])
    # fc2 + tanh (the dominant Hp x Hp matmul, lane-dense)
    h2 = jnp.tanh(
        jnp.dot(h1, w2_ref[...], preferred_element_type=jnp.float32)
        + b2_ref[...])
    # fc3 logits over the true action dim (no padded columns).
    logits = (jnp.dot(h2, w3_ref[...], preferred_element_type=jnp.float32)
              + b3_ref[...])
    # Numerically stable row-wise softmax over the action axis.
    m = jnp.max(logits, axis=-1, keepdims=True)
    e = jnp.exp(logits - m)
    probs = e / jnp.sum(e, axis=-1, keepdims=True)
    o_ref[...] = probs.astype(o_ref.dtype)


def pad_actor_params(params, *, weights_dtype=jnp.float32):
    """One-time (off the hot path) padding of the hidden dim to a multiple of
    128 so fc2 is lane-dense.  Zero rows/cols + zero bias keep the math exact
    (tanh(0)=0 meets zero weight rows downstream).  Biases stay f32.
    weights_dtype=jnp.bfloat16 gives 2-4x on v5e's MXU at ~1e-3 tolerance."""
    w1, b1, w2, b2, w3, b3 = (params[k] for k in ("w1", "b1", "w2", "b2", "w3", "b3"))
    in_dim, hidden = w1.shape
    out_dim = w3.shape[1]
    Hp = _round_up(hidden, LANE)
    wd = weights_dtype
    f32 = jnp.float32

    w1p = jnp.zeros((in_dim, Hp), wd).at[:, :hidden].set(w1.astype(wd))
    b1p = jnp.zeros((1, Hp), f32).at[:, :hidden].set(b1.astype(f32))
    w2p = jnp.zeros((Hp, Hp), wd).at[:hidden, :hidden].set(w2.astype(wd))
    b2p = jnp.zeros((1, Hp), f32).at[:, :hidden].set(b2.astype(f32))
    w3p = jnp.zeros((Hp, out_dim), wd).at[:hidden, :].set(w3.astype(wd))
    b3p = b3.astype(f32).reshape(1, out_dim)
    return {"w1": w1p, "b1": b1p, "w2": w2p, "b2": b2p, "w3": w3p, "b3": b3p}


def actor_forward(x, padded_params, *, tile_b=2048, min_grid_steps=2):
    """x: (B, input_dim) f32.  padded_params: output of pad_actor_params."""
    w1p, b1p, w2p, b2p, w3p, b3p = (
        padded_params[k] for k in ("w1", "b1", "w2", "b2", "w3", "b3"))
    B, in_dim = x.shape
    assert in_dim == w1p.shape[0]
    Hp = w1p.shape[1]
    out_dim = w3p.shape[1]
    f32 = jnp.float32

    # Batch tile: big enough to amortize per-grid-step overhead (~0.35 us),
    # capped so big batches always give >= min_grid_steps tiles (v7x megacore
    # + DMA/compute overlap).  Sublane-aligned for small batches.
    cap = _round_up(pl.cdiv(B, min_grid_steps), SUBLANE)
    TILE_B = max(SUBLANE, min(tile_b, cap))
    Bp = _round_up(B, TILE_B)

    xp = x.astype(f32)
    if Bp != B:
        xp = jnp.zeros((Bp, in_dim), f32).at[:B].set(xp)

    grid = (Bp // TILE_B,)

    # Advisory cost for XLA's scheduler around the custom call.
    flops = 2 * Bp * (in_dim * Hp + Hp * Hp + Hp * out_dim)
    transcendentals = Bp * (2 * Hp + out_dim)
    bytes_accessed = int(
        xp.nbytes + Bp * out_dim * 4
        + sum(p.nbytes for p in (w1p, b1p, w2p, b2p, w3p, b3p)))
    cost = pl.CostEstimate(flops=flops, transcendentals=transcendentals,
                           bytes_accessed=bytes_accessed)

    def run(resident_pipeline_mode):
        # Constant index_map -> weights/biases stay VMEM-resident across steps.
        def resident(a):
            nd = a.ndim
            kwargs = {}
            if resident_pipeline_mode is not None:
                kwargs["pipeline_mode"] = resident_pipeline_mode
            return pl.BlockSpec(a.shape, lambda i: (0,) * nd, **kwargs)

        return pl.pallas_call(
            actor_kernel,
            out_shape=jax.ShapeDtypeStruct((Bp, out_dim), f32),
            grid=grid,
            in_specs=[
                pl.BlockSpec((TILE_B, in_dim), lambda i: (i, 0)),  # x: pipelined over batch
                resident(w1p), resident(b1p),
                resident(w2p), resident(b2p),
                resident(w3p), resident(b3p),
            ],
            out_specs=pl.BlockSpec((TILE_B, out_dim), lambda i: (i, 0)),
            compiler_params=pltpu.CompilerParams(
                dimension_semantics=("parallel",)),  # v7x: shard batch tiles over 2 TCs
            cost_estimate=cost,
        )(xp, w1p, b1p, w2p, b2p, w3p, b3p)

    try:
        # Single-buffer the resident weights (constant index_map): saves a
        # redundant ~0.5 MiB VMEM copy + prologue DMAs.
        probs_padded = run(pl.Buffered(1))
    except Exception:
        # Fallback for JAX versions without pipeline_mode / Buffered(1) support.
        probs_padded = run(None)

    return probs_padded[:B]


def init_actor_params(key, input_dim, output_dim, hidden_dim=256):
    """PyTorch-style uniform(-1/sqrt(fan_in), 1/sqrt(fan_in)) init.
    Weights stored as (in_features, out_features)."""
    ks = jax.random.split(key, 6)

    def lin(kw, kb, fan_in, fan_out):
        bound = 1.0 / jnp.sqrt(jnp.float32(fan_in))
        w = jax.random.uniform(kw, (fan_in, fan_out), jnp.float32, -bound, bound)
        b = jax.random.uniform(kb, (1, fan_out), jnp.float32, -bound, bound)
        return w, b

    w1, b1 = lin(ks[0], ks[1], input_dim, hidden_dim)
    w2, b2 = lin(ks[2], ks[3], hidden_dim, hidden_dim)
    w3, b3 = lin(ks[4], ks[5], hidden_dim, output_dim)
    return {"w1": w1, "b1": b1, "w2": w2, "b2": b2, "w3": w3, "b3": b3}


def actor_reference(x, p):
    h1 = jnp.tanh(x @ p["w1"] + p["b1"])
    h2 = jnp.tanh(h1 @ p["w2"] + p["b2"])
    return jax.nn.softmax(h2 @ p["w3"] + p["b3"], axis=1)


if __name__ == "__main__":
    key = jax.random.PRNGKey(0)
    k_x, k_p = jax.random.split(key)

    batch, input_dim, hidden_dim, output_dim = 8, 4, 32, 6
    x = jax.random.normal(k_x, (batch, input_dim), jnp.float32)
    params = init_actor_params(k_p, input_dim, output_dim, hidden_dim)

    # Pad/convert weights ONCE, off the forward hot path.
    padded = pad_actor_params(params)

    probs = actor_forward(x, padded)
    probs = jax.block_until_ready(probs)

    ref = actor_reference(x, params)
    assert probs.shape == (batch, output_dim)
    assert jnp.allclose(probs, ref, atol=1e-5, rtol=1e-5)
    # softmax rows must sum to 1
    assert jnp.allclose(jnp.sum(probs, axis=1), jnp.ones((batch,)), atol=1e-5)

    print("KERNEL_OK")
</pallas_src>

<mosaic_0001>
module attributes {stable_mosaic.version = 11 : i64} {
  func.func @actor_kernel(%arg0: i32, %arg1: memref<8x4xf32, #tpu.memory_space<vmem>>, %arg2: memref<4x128xf32, #tpu.memory_space<vmem>>, %arg3: memref<1x128xf32, #tpu.memory_space<vmem>>, %arg4: memref<128x128xf32, #tpu.memory_space<vmem>>, %arg5: memref<1x128xf32, #tpu.memory_space<vmem>>, %arg6: memref<128x6xf32, #tpu.memory_space<vmem>>, %arg7: memref<1x6xf32, #tpu.memory_space<vmem>>, %arg8: memref<8x6xf32, #tpu.memory_space<vmem>>) attributes {dimension_semantics = [#tpu.dimension_semantics<parallel>], iteration_bounds = array<i64: 1>, scalar_prefetch = 0 : i64, scratch_operands = 0 : i64, tpu.core_type = #tpu.core_type<tc>, window_params = [{transform_indices = @transform_0, window_bounds = array<i64: 8, 4>}, {pipeline_mode = #tpu.pipeline_mode<synchronous>, transform_indices = @transform_1, window_bounds = array<i64: 4, 128>}, {pipeline_mode = #tpu.pipeline_mode<synchronous>, transform_indices = @transform_2, window_bounds = array<i64: 1, 128>}, {pipeline_mode = #tpu.pipeline_mode<synchronous>, transform_indices = @transform_3, window_bounds = array<i64: 128, 128>}, {pipeline_mode = #tpu.pipeline_mode<synchronous>, transform_indices = @transform_4, window_bounds = array<i64: 1, 128>}, {pipeline_mode = #tpu.pipeline_mode<synchronous>, transform_indices = @transform_5, window_bounds = array<i64: 128, 6>}, {pipeline_mode = #tpu.pipeline_mode<synchronous>, transform_indices = @transform_6, window_bounds = array<i64: 1, 6>}, {transform_indices = @transform_7, window_bounds = array<i64: 8, 6>}]} {
    %c0 = arith.constant 0 : index
    %c0_0 = arith.constant 0 : index
    %0 = vector.load %arg1[%c0, %c0_0] : memref<8x4xf32, #tpu.memory_space<vmem>>, vector<8x4xf32>
    %c0_1 = arith.constant 0 : index
    %c0_2 = arith.constant 0 : index
    %1 = vector.load %arg2[%c0_1, %c0_2] : memref<4x128xf32, #tpu.memory_space<vmem>>, vector<4x128xf32>
    %cst = arith.constant dense<0.000000e+00> : vector<8x128xf32>
    %2 = tpu.matmul %0, %1, %cst {dimension_numbers = #tpu.dot_dimension_numbers<[1], [0], [0], [1], [0, 0, 1, 1], [], []>} : vector<8x4xf32>, vector<4x128xf32>, vector<8x128xf32> -> vector<8x128xf32>
    %c0_3 = arith.constant 0 : index
    %c0_4 = arith.constant 0 : index
    %3 = vector.load %arg3[%c0_3, %c0_4] : memref<1x128xf32, #tpu.memory_space<vmem>>, vector<1x128xf32>
    %4 = vector.broadcast %3 : vector<1x128xf32> to vector<8x128xf32>
    %5 = arith.addf %2, %4 : vector<8x128xf32>
    %6 = math.tanh %5 : vector<8x128xf32>
    %c0_5 = arith.constant 0 : index
    %c0_6 = arith.constant 0 : index
    %7 = vector.load %arg4[%c0_5, %c0_6] : memref<128x128xf32, #tpu.memory_space<vmem>>, vector<128x128xf32>
    %cst_7 = arith.constant dense<0.000000e+00> : vector<8x128xf32>
    %8 = tpu.matmul %6, %7, %cst_7 {dimension_numbers = #tpu.dot_dimension_numbers<[1], [0], [0], [1], [0, 0, 1, 1], [], []>} : vector<8x128xf32>, vector<128x128xf32>, vector<8x128xf32> -> vector<8x128xf32>
    %c0_8 = arith.constant 0 : index
    %c0_9 = arith.constant 0 : index
    %9 = vector.load %arg5[%c0_8, %c0_9] : memref<1x128xf32, #tpu.memory_space<vmem>>, vector<1x128xf32>
    %10 = vector.broadcast %9 : vector<1x128xf32> to vector<8x128xf32>
    %11 = arith.addf %8, %10 : vector<8x128xf32>
    %12 = math.tanh %11 : vector<8x128xf32>
    %c0_10 = arith.constant 0 : index
    %c0_11 = arith.constant 0 : index
    %13 = vector.load %arg6[%c0_10, %c0_11] : memref<128x6xf32, #tpu.memory_space<vmem>>, vector<128x6xf32>
    %cst_12 = arith.constant dense<0.000000e+00> : vector<8x6xf32>
    %14 = tpu.matmul %12, %13, %cst_12 {dimension_numbers = #tpu.dot_dimension_numbers<[1], [0], [0], [1], [0, 0, 1, 1], [], []>} : vector<8x128xf32>, vector<128x6xf32>, vector<8x6xf32> -> vector<8x6xf32>
    %c0_13 = arith.constant 0 : index
    %c0_14 = arith.constant 0 : index
    %15 = vector.load %arg7[%c0_13, %c0_14] : memref<1x6xf32, #tpu.memory_space<vmem>>, vector<1x6xf32>
    %16 = vector.broadcast %15 : vector<1x6xf32> to vector<8x6xf32>
    %17 = arith.addf %14, %16 : vector<8x6xf32>
    %cst_15 = arith.constant dense<0xFF800000> : vector<8xf32>
    %18 = vector.multi_reduction <maximumf>, %17, %cst_15 [1] : vector<8x6xf32> to vector<8xf32>
    %19 = vector.shape_cast %18 : vector<8xf32> to vector<8x1xf32>
    %20 = vector.broadcast %19 : vector<8x1xf32> to vector<8x6xf32>
    %21 = arith.subf %17, %20 : vector<8x6xf32>
    %22 = math.exp %21 : vector<8x6xf32>
    %cst_16 = arith.constant dense<0.000000e+00> : vector<8xf32>
    %23 = vector.multi_reduction <add>, %22, %cst_16 [1] : vector<8x6xf32> to vector<8xf32>
    %24 = vector.shape_cast %23 : vector<8xf32> to vector<8x1xf32>
    %25 = vector.broadcast %24 : vector<8x1xf32> to vector<8x6xf32>
    %26 = arith.divf %22, %25 : vector<8x6xf32>
    %c0_17 = arith.constant 0 : index
    %c0_18 = arith.constant 0 : index
    %27 = vector.load %arg8[%c0_17, %c0_18] : memref<8x6xf32, #tpu.memory_space<vmem>>, vector<8x6xf32>
    tpu.vector_store %arg8[%c0_17, %c0_18], %26 {strides = array<i32>} : memref<8x6xf32, #tpu.memory_space<vmem>>, vector<8x6xf32>,
    return
  }
  func.func @transform_0(%arg0: i32) -> (i32, i32) {
    %c0_i32 = arith.constant 0 : i32
    %c0_i32_0 = arith.constant 0 : i32
    return %arg0, %c0_i32 : i32, i32
  }
  func.func @transform_1(%arg0: i32) -> (i32, i32) {
    %c0_i32 = arith.constant 0 : i32
    %c0_i32_0 = arith.constant 0 : i32
    %c0_i32_1 = arith.constant 0 : i32
    return %c0_i32, %c0_i32_0 : i32, i32
  }
  func.func @transform_2(%arg0: i32) -> (i32, i32) {
    %c0_i32 = arith.constant 0 : i32
    %c0_i32_0 = arith.constant 0 : i32
    %c0_i32_1 = arith.constant 0 : i32
    return %c0_i32, %c0_i32_0 : i32, i32
  }
  func.func @transform_3(%arg0: i32) -> (i32, i32) {
    %c0_i32 = arith.constant 0 : i32
    %c0_i32_0 = arith.constant 0 : i32
    %c0_i32_1 = arith.constant 0 : i32
    return %c0_i32, %c0_i32_0 : i32, i32
  }
  func.func @transform_4(%arg0: i32) -> (i32, i32) {
    %c0_i32 = arith.constant 0 : i32
    %c0_i32_0 = arith.constant 0 : i32
    %c0_i32_1 = arith.constant 0 : i32
    return %c0_i32, %c0_i32_0 : i32, i32
  }
  func.func @transform_5(%arg0: i32) -> (i32, i32) {
    %c0_i32 = arith.constant 0 : i32
    %c0_i32_0 = arith.constant 0 : i32
    %c0_i32_1 = arith.constant 0 : i32
    return %c0_i32, %c0_i32_0 : i32, i32
  }
  func.func @transform_6(%arg0: i32) -> (i32, i32) {
    %c0_i32 = arith.constant 0 : i32
    %c0_i32_0 = arith.constant 0 : i32
    %c0_i32_1 = arith.constant 0 : i32
    return %c0_i32, %c0_i32_0 : i32, i32
  }
  func.func @transform_7(%arg0: i32) -> (i32, i32) {
    %c0_i32 = arith.constant 0 : i32
    %c0_i32_0 = arith.constant 0 : i32
    return %arg0, %c0_i32 : i32, i32
  }
}

module attributes {stable_mosaic.version = 11 : i64} {
  func.func @actor_kernel(%arg0: i32, %arg1: memref<8x4xf32, #tpu.memory_space<vmem>>, %arg2: memref<4x128xf32, #tpu.memory_space<vmem>>, %arg3: memref<1x128xf32, #tpu.memory_space<vmem>>, %arg4: memref<128x128xf32, #tpu.memory_space<vmem>>, %arg5: memref<1x128xf32, #tpu.memory_space<vmem>>, %arg6: memref<128x6xf32, #tpu.memory_space<vmem>>, %arg7: memref<1x6xf32, #tpu.memory_space<vmem>>, %arg8: memref<8x6xf32, #tpu.memory_space<vmem>>) attributes {dimension_semantics = [#tpu.dimension_semantics<parallel>], iteration_bounds = array<i64: 1>, scalar_prefetch = 0 : i64, scratch_operands = 0 : i64, tpu.core_type = #tpu.core_type<tc>, window_params = [{transform_indices = @transform_0, window_bounds = array<i64: 8, 4>}, {pipeline_mode = #tpu.pipeline_mode<synchronous>, transform_indices = @transform_1, window_bounds = array<i64: 4, 128>}, {pipeline_mode = #tpu.pipeline_mode<synchronous>, transform_indices = @transform_2, window_bounds = array<i64: 1, 128>}, {pipeline_mode = #tpu.pipeline_mode<synchronous>, transform_indices = @transform_3, window_bounds = array<i64: 128, 128>}, {pipeline_mode = #tpu.pipeline_mode<synchronous>, transform_indices = @transform_4, window_bounds = array<i64: 1, 128>}, {pipeline_mode = #tpu.pipeline_mode<synchronous>, transform_indices = @transform_5, window_bounds = array<i64: 128, 6>}, {pipeline_mode = #tpu.pipeline_mode<synchronous>, transform_indices = @transform_6, window_bounds = array<i64: 1, 6>}, {transform_indices = @transform_7, window_bounds = array<i64: 8, 6>}]} {
    %c0 = arith.constant 0 : index
    %c0_0 = arith.constant 0 : index
    %0 = vector.load %arg1[%c0, %c0_0] : memref<8x4xf32, #tpu.memory_space<vmem>>, vector<8x4xf32>
    %c0_1 = arith.constant 0 : index
    %c0_2 = arith.constant 0 : index
    %1 = vector.load %arg2[%c0_1, %c0_2] : memref<4x128xf32, #tpu.memory_space<vmem>>, vector<4x128xf32>
    %cst = arith.constant dense<0.000000e+00> : vector<8x128xf32>
    %2 = tpu.matmul %0, %1, %cst {dimension_numbers = #tpu.dot_dimension_numbers<[1], [0], [0], [1], [0, 0, 1, 1], [], []>} : vector<8x4xf32>, vector<4x128xf32>, vector<8x128xf32> -> vector<8x128xf32>
    %c0_3 = arith.constant 0 : index
    %c0_4 = arith.constant 0 : index
    %3 = vector.load %arg3[%c0_3, %c0_4] : memref<1x128xf32, #tpu.memory_space<vmem>>, vector<1x128xf32>
    %4 = vector.broadcast %3 : vector<1x128xf32> to vector<8x128xf32>
    %5 = arith.addf %2, %4 : vector<8x128xf32>
    %6 = math.tanh %5 : vector<8x128xf32>
    %c0_5 = arith.constant 0 : index
    %c0_6 = arith.constant 0 : index
    %7 = vector.load %arg4[%c0_5, %c0_6] : memref<128x128xf32, #tpu.memory_space<vmem>>, vector<128x128xf32>
    %cst_7 = arith.constant dense<0.000000e+00> : vector<8x128xf32>
    %8 = tpu.matmul %6, %7, %cst_7 {dimension_numbers = #tpu.dot_dimension_numbers<[1], [0], [0], [1], [0, 0, 1, 1], [], []>} : vector<8x128xf32>, vector<128x128xf32>, vector<8x128xf32> -> vector<8x128xf32>
    %c0_8 = arith.constant 0 : index
    %c0_9 = arith.constant 0 : index
    %9 = vector.load %arg5[%c0_8, %c0_9] : memref<1x128xf32, #tpu.memory_space<vmem>>, vector<1x128xf32>
    %10 = vector.broadcast %9 : vector<1x128xf32> to vector<8x128xf32>
    %11 = arith.addf %8, %10 : vector<8x128xf32>
    %12 = math.tanh %11 : vector<8x128xf32>
    %c0_10 = arith.constant 0 : index
    %c0_11 = arith.constant 0 : index
    %13 = vector.load %arg6[%c0_10, %c0_11] : memref<128x6xf32, #tpu.memory_space<vmem>>, vector<128x6xf32>
    %cst_12 = arith.constant dense<0.000000e+00> : vector<8x6xf32>
    %14 = tpu.matmul %12, %13, %cst_12 {dimension_numbers = #tpu.dot_dimension_numbers<[1], [0], [0], [1], [0, 0, 1, 1], [], []>} : vector<8x128xf32>, vector<128x6xf32>, vector<8x6xf32> -> vector<8x6xf32>
    %c0_13 = arith.constant 0 : index
    %c0_14 = arith.constant 0 : index
    %15 = vector.load %arg7[%c0_13, %c0_14] : memref<1x6xf32, #tpu.memory_space<vmem>>, vector<1x6xf32>
    %16 = vector.broadcast %15 : vector<1x6xf32> to vector<8x6xf32>
    %17 = arith.addf %14, %16 : vector<8x6xf32>
    %cst_15 = arith.constant dense<0xFF800000> : vector<8xf32>
    %18 = vector.multi_reduction <maximumf>, %17, %cst_15 [1] : vector<8x6xf32> to vector<8xf32>
    %19 = vector.shape_cast %18 : vector<8xf32> to vector<8x1xf32>
    %20 = vector.broadcast %19 : vector<8x1xf32> to vector<8x6xf32>
    %21 = arith.subf %17, %20 : vector<8x6xf32>
    %22 = math.exp %21 : vector<8x6xf32>
    %cst_16 = arith.constant dense<0.000000e+00> : vector<8xf32>
    %23 = vector.multi_reduction <add>, %22, %cst_16 [1] : vector<8x6xf32> to vector<8xf32>
    %24 = vector.shape_cast %23 : vector<8xf32> to vector<8x1xf32>
    %25 = vector.broadcast %24 : vector<8x1xf32> to vector<8x6xf32>
    %26 = arith.divf %22, %25 : vector<8x6xf32>
    %c0_17 = arith.constant 0 : index
    %c0_18 = arith.constant 0 : index
    %27 = vector.load %arg8[%c0_17, %c0_18] : memref<8x6xf32, #tpu.memory_space<vmem>>, vector<8x6xf32>
    tpu.vector_store %arg8[%c0_17, %c0_18], %26 {strides = array<i32>} : memref<8x6xf32, #tpu.memory_space<vmem>>, vector<8x6xf32>,
    return
  }
  func.func @transform_0(%arg0: i32) -> (i32, i32) {
    %c0_i32 = arith.constant 0 : i32
    %c0_i32_0 = arith.constant 0 : i32
    return %arg0, %c0_i32 : i32, i32
  }
  func.func @transform_1(%arg0: i32) -> (i32, i32) {
    %c0_i32 = arith.constant 0 : i32
    %c0_i32_0 = arith.constant 0 : i32
    %c0_i32_1 = arith.constant 0 : i32
    return %c0_i32, %c0_i32_0 : i32, i32
  }
  func.func @transform_2(%arg0: i32) -> (i32, i32) {
    %c0_i32 = arith.constant 0 : i32
    %c0_i32_0 = arith.constant 0 : i32
    %c0_i32_1 = arith.constant 0 : i32
    return %c0_i32, %c0_i32_0 : i32, i32
  }
  func.func @transform_3(%arg0: i32) -> (i32, i32) {
    %c0_i32 = arith.constant 0 : i32
    %c0_i32_0 = arith.constant 0 : i32
    %c0_i32_1 = arith.constant 0 : i32
    return %c0_i32, %c0_i32_0 : i32, i32
  }
  func.func @transform_4(%arg0: i32) -> (i32, i32) {
    %c0_i32 = arith.constant 0 : i32
    %c0_i32_0 = arith.constant 0 : i32
    %c0_i32_1 = arith.constant 0 : i32
    return %c0_i32, %c0_i32_0 : i32, i32
  }
  func.func @transform_5(%arg0: i32) -> (i32, i32) {
    %c0_i32 = arith.constant 0 : i32
    %c0_i32_0 = arith.constant 0 : i32
    %c0_i32_1 = arith.constant 0 : i32
    return %c0_i32, %c0_i32_0 : i32, i32
  }
  func.func @transform_6(%arg0: i32) -> (i32, i32) {
    %c0_i32 = arith.constant 0 : i32
    %c0_i32_0 = arith.constant 0 : i32
    %c0_i32_1 = arith.constant 0 : i32
    return %c0_i32, %c0_i32_0 : i32, i32
  }
  func.func @transform_7(%arg0: i32) -> (i32, i32) {
    %c0_i32 = arith.constant 0 : i32
    %c0_i32_0 = arith.constant 0 : i32
    return %arg0, %c0_i32 : i32, i32
  }
}

</mosaic_0001>

<llo_original>
// kernel: tpu_custom_call.1
$region0: #{tpu_custom_call.1}
  #allocation0 [shape = 'u32[]', space=smem, size = 0x4, offset = 0x4, fixed_abs, tag = 'smem constant byte address 0x4 - core index']
  #allocation1 [shape = 'u32[144,128]{1,0:T(1,128)}', space=vmem, size = 0x12000, scoped, tag = 'internal scratch']
  %s0 = inlined_call_operand.vmem [shape: f32[8,4], index: 0, kind: input, shape index: {}]
  %s1 = inlined_call_operand.vmem [shape: f32[4,128], index: 1, kind: input, shape index: {}]
  %s2 = inlined_call_operand.vmem [shape: f32[1,128], index: 2, kind: input, shape index: {}]
  %s3 = inlined_call_operand.vmem [shape: f32[128,128], index: 3, kind: input, shape index: {}]
  %s4 = inlined_call_operand.vmem [shape: f32[1,128], index: 4, kind: input, shape index: {}]
  %s5 = inlined_call_operand.vmem [shape: f32[128,6], index: 5, kind: input, shape index: {}]
  %s6 = inlined_call_operand.vmem [shape: f32[1,6], index: 6, kind: input, shape index: {}]
  %s7 = inlined_call_operand.hbm [shape: f32[8,6], index: 7, kind: output, shape index: {}]
  %s8 = sld [smem:[#allocation0]]
  $region38: #{tpu_custom_call.1} parent=0
    _
  %s10 = ssub.s32 1, %s8
  %s11 = scalar_select 0, %s10, %s8
  $region1: #{tpu_custom_call.1} parent=0
    #allocation2 [shape = 'u8[4096]{0}', space=vmem, size = 0x1000, scoped, tag = 'output window, operand 0, single buffered']
    #allocation3 [shape = 's32[1]{0}', space=sflag, size = 0x4, scoped, tag = 'scoped memory for tpu_custom_call.1']
    %12 = vsyncpa [#allocation3], 0
    // Predicated region
    $region2: #{tpu_custom_call.1} parent=1 // pred_check
      _
    $region3: #{tpu_custom_call.1} parent=1 // pred_check_branch
      %14 = sbr.rel (0) target = $region5
    $region4: #{tpu_custom_call.1} parent=1 // pred_region
      _
    $region5: #{tpu_custom_call.1} parent=1 // pred_fallthru
      _
    // Predicated region
    $region6: #{tpu_custom_call.1} parent=1 // pred_check
      _
    $region7: #{tpu_custom_call.1} parent=1 // pred_check_branch
      %16 = sbr.rel (0) target = $region9
    $region8: #{tpu_custom_call.1} parent=1 // pred_region
      _
    $region9: #{tpu_custom_call.1} parent=1 // pred_fallthru
      _
    // Predicated region
    $region10: #{tpu_custom_call.1} parent=1 // pred_check
      _
    $region11: #{tpu_custom_call.1} parent=1 // pred_check_branch
      %18 = sbr.rel (0) target = $region13
    $region12: #{tpu_custom_call.1} parent=1 // pred_region
      _
    $region13: #{tpu_custom_call.1} parent=1 // pred_fallthru
      _
    // Predicated region
    $region14: #{tpu_custom_call.1} parent=1 // pred_check
      _
    $region15: #{tpu_custom_call.1} parent=1 // pred_check_branch
      %20 = sbr.rel (0) target = $region17
    $region16: #{tpu_custom_call.1} parent=1 // pred_region
      _
    $region17: #{tpu_custom_call.1} parent=1 // pred_fallthru
      _
    // Predicated region
    $region18: #{tpu_custom_call.1} parent=1 // pred_check
      _
    $region19: #{tpu_custom_call.1} parent=1 // pred_check_branch
      %22 = sbr.rel (0) target = $region21
    $region20: #{tpu_custom_call.1} parent=1 // pred_region
      _
    $region21: #{tpu_custom_call.1} parent=1 // pred_fallthru
      _
    // Predicated region
    $region22: #{tpu_custom_call.1} parent=1 // pred_check
      _
    $region23: #{tpu_custom_call.1} parent=1 // pred_check_branch
      %24 = sbr.rel (0) target = $region25
    $region24: #{tpu_custom_call.1} parent=1 // pred_region
      _
    $region25: #{tpu_custom_call.1} parent=1 // pred_fallthru
      _
    // Predicated region
    $region26: #{tpu_custom_call.1} parent=1 // pred_check
      _
    $region27: #{tpu_custom_call.1} parent=1 // pred_check_branch
      %26 = sbr.rel (0) target = $region29
    $region28: #{tpu_custom_call.1} parent=1 // pred_region
      _
    $region29: #{tpu_custom_call.1} parent=1 // pred_fallthru
      _
    %v27 = vld [vmem:[%s0] sm:$0xff]
    %v28 = vld [vmem:[%s1] sm:$0xf]
    %v29 = vld [vmem:[%s2] sm:$0x1]
    %v31 = vlaneseq
    %v32 = vshrl.u32 %v31, 7
    %v33 = vsub.s32 0, %v32
    %v34 = vrot.slane %v29, %v33
    %vm36 = vcmask 31744
    %v38 = vsel %vm36, %v27, 0
    %vm40 = vcmask 1043456
    %v42 = vsel %vm40, %v28, 0
    %44 = vmatprep.subr.mxu0 0.0
    %45 = vmatpush1.msra.mxu0 0.0
    %46 = vmatprep.subr.mxu0 0.0
    %47 = vmatpush1.msra.mxu0 0.0
    %48 = vmatprep.subr.mxu0 0.0
    %49 = vmatpush1.msra.mxu0 0.0
    %50 = vmatprep.subr.mxu0 0.0
    %51 = vmatpush1.msra.mxu0 0.0
    %52 = vmatprep.subr.mxu0 0.0
    %53 = vmatpush1.msra.mxu0 0.0
    %54 = vmatprep.subr.mxu0 0.0
    %55 = vmatpush1.msra.mxu0 0.0
    %56 = vmatprep.subr.mxu0 0.0
    %57 = vmatpush1.msra.mxu0 0.0
    %58 = vmatprep.subr.mxu0 0.0
    %59 = vmatpush1.msra.mxu0 0.0
    %60 = vmatprep.subr.mxu0 0.0
    %61 = vmatpush1.msra.mxu0 0.0
    %62 = vmatprep.subr.mxu0 0.0
    %63 = vmatpush1.msra.mxu0 0.0
    %64 = vmatprep.subr.mxu0 0.0
    %65 = vmatpush1.msra.mxu0 0.0
    %66 = vmatprep.subr.mxu0 0.0
    %67 = vmatpush1.msra.mxu0 0.0
    %68 = vmatprep.subr.mxu0 0.0
    %69 = vmatpush1.msra.mxu0 0.0
    %70 = vmatprep.subr.mxu0 0.0
    %71 = vmatpush1.msra.mxu0 0.0
    %72 = vmatprep.subr.mxu0 0.0
    %73 = vmatpush1.msra.mxu0 0.0
    %74 = vmatprep.subr.mxu0 0.0
    %75 = vmatpush1.msra.mxu0 %v42
    %76 = vmatprep.subr.mxu0 0.0
    %77 = vmatpush2.msra.mxu0 0.0
    %78 = vmatprep.subr.mxu0 0.0
    %79 = vmatpush2.msra.mxu0 0.0
    %80 = vmatprep.subr.mxu0 0.0
    %81 = vmatpush2.msra.mxu0 0.0
    %82 = vmatprep.subr.mxu0 0.0
    %83 = vmatpush2.msra.mxu0 0.0
    %84 = vmatprep.subr.mxu0 0.0
    %85 = vmatpush2.msra.mxu0 0.0
    %86 = vmatprep.subr.mxu0 0.0
    %87 = vmatpush2.msra.mxu0 0.0
    %88 = vmatprep.subr.mxu0 0.0
    %89 = vmatpush2.msra.mxu0 0.0
    %90 = vmatprep.subr.mxu0 0.0
    %91 = vmatpush2.msra.mxu0 0.0
    %92 = vmatprep.subr.mxu0 0.0
    %93 = vmatpush2.msra.mxu0 0.0
    %94 = vmatprep.subr.mxu0 0.0
    %95 = vmatpush2.msra.mxu0 0.0
    %96 = vmatprep.subr.mxu0 0.0
    %97 = vmatpush2.msra.mxu0 0.0
    %98 = vmatprep.subr.mxu0 0.0
    %99 = vmatpush2.msra.mxu0 0.0
    %100 = vmatprep.subr.mxu0 0.0
    %101 = vmatpush2.msra.mxu0 0.0
    %102 = vmatprep.subr.mxu0 0.0
    %103 = vmatpush2.msra.mxu0 0.0
    %104 = vmatprep.subr.mxu0 0.0
    %105 = vmatpush2.msra.mxu0 0.0
    %106 = vmatprep.subr.mxu0 0.0
    %107 = vmatpush2.msra.mxu0 0.0
    %108 = vmatprep.mubr.f32.mxu0 0.0
    %109 = vmatmul.mubr.f32.gmra.mxu0 %v38
    %v110 = vpop.f32.mrf.mxu0
    %v111 = vadd.f32 %v34, %v110
    %v112 = vpop.f32.mrf.mxu0
    %113 = vdwg.mxu0
    %v114 = vtanh.pop %v111
    %v115 = vld [vmem:[%s3] sm:$0xff]
    %v116 = vld [vmem:[%s3 + $0x8] sm:$0xff]
    %v117 = vld [vmem:[%s3 + $0x10] sm:$0xff]
    %v118 = vld [vmem:[%s3 + $0x18] sm:$0xff]
    %v119 = vld [vmem:[%s3 + $0x20] sm:$0xff]
    %v120 = vld [vmem:[%s3 + $0x28] sm:$0xff]
    %v121 = vld [vmem:[%s3 + $0x30] sm:$0xff]
    %v122 = vld [vmem:[%s3 + $0x38] sm:$0xff]
    %v123 = vld [vmem:[%s3 + $0x40] sm:$0xff]
    %v124 = vld [vmem:[%s3 + $0x48] sm:$0xff]
    %v125 = vld [vmem:[%s3 + $0x50] sm:$0xff]
    %v126 = vld [vmem:[%s3 + $0x58] sm:$0xff]
    %v127 = vld [vmem:[%s3 + $0x60] sm:$0xff]
    %v128 = vld [vmem:[%s3 + $0x68] sm:$0xff]
    %v129 = vld [vmem:[%s3 + $0x70] sm:$0xff]
    %v130 = vld [vmem:[%s3 + $0x78] sm:$0xff]
    %v131 = vld [vmem:[%s4] sm:$0x1]
    %v133 = vlaneseq
    %v134 = vshrl.u32 %v133, 7
    %v135 = vsub.s32 0, %v134
    %v136 = vrot.slane %v131, %v135
    %138 = vmatprep.subr.mxu0 0.0
    %139 = vmatpush1.msra.mxu0 %v130
    %140 = vmatprep.subr.mxu0 0.0
    %141 = vmatpush1.msra.mxu0 %v129
    %142 = vmatprep.subr.mxu0 0.0
    %143 = vmatpush1.msra.mxu0 %v128
    %144 = vmatprep.subr.mxu0 0.0
    %145 = vmatpush1.msra.mxu0 %v127
    %146 = vmatprep.subr.mxu0 0.0
    %147 = vmatpush1.msra.mxu0 %v126
    %148 = vmatprep.subr.mxu0 0.0
    %149 = vmatpush1.msra.mxu0 %v125
    %150 = vmatprep.subr.mxu0 0.0
    %151 = vmatpush1.msra.mxu0 %v124
    %152 = vmatprep.subr.mxu0 0.0
    %153 = vmatpush1.msra.mxu0 %v123
    %154 = vmatprep.subr.mxu0 0.0
    %155 = vmatpush1.msra.mxu0 %v122
    %156 = vmatprep.subr.mxu0 0.0
    %157 = vmatpush1.msra.mxu0 %v121
    %158 = vmatprep.subr.mxu0 0.0
    %159 = vmatpush1.msra.mxu0 %v120
    %160 = vmatprep.subr.mxu0 0.0
    %161 = vmatpush1.msra.mxu0 %v119
    %162 = vmatprep.subr.mxu0 0.0
    %163 = vmatpush1.msra.mxu0 %v118
    %164 = vmatprep.subr.mxu0 0.0
    %165 = vmatpush1.msra.mxu0 %v117
    %166 = vmatprep.subr.mxu0 0.0
    %167 = vmatpush1.msra.mxu0 %v116
    %168 = vmatprep.subr.mxu0 0.0
    %169 = vmatpush1.msra.mxu0 %v115
    %170 = vmatprep.subr.mxu0 0.0
    %171 = vmatpush2.msra.mxu0 0.0
    %172 = vmatprep.subr.mxu0 0.0
    %173 = vmatpush2.msra.mxu0 0.0
    %174 = vmatprep.subr.mxu0 0.0
    %175 = vmatpush2.msra.mxu0 0.0
    %176 = vmatprep.subr.mxu0 0.0
    %177 = vmatpush2.msra.mxu0 0.0
    %178 = vmatprep.subr.mxu0 0.0
    %179 = vmatpush2.msra.mxu0 0.0
    %180 = vmatprep.subr.mxu0 0.0
    %181 = vmatpush2.msra.mxu0 0.0
    %182 = vmatprep.subr.mxu0 0.0
    %183 = vmatpush2.msra.mxu0 0.0
    %184 = vmatprep.subr.mxu0 0.0
    %185 = vmatpush2.msra.mxu0 0.0
    %186 = vmatprep.subr.mxu0 0.0
    %187 = vmatpush2.msra.mxu0 0.0
    %188 = vmatprep.subr.mxu0 0.0
    %189 = vmatpush2.msra.mxu0 0.0
    %190 = vmatprep.subr.mxu0 0.0
    %191 = vmatpush2.msra.mxu0 0.0
    %192 = vmatprep.subr.mxu0 0.0
    %193 = vmatpush2.msra.mxu0 0.0
    %194 = vmatprep.subr.mxu0 0.0
    %195 = vmatpush2.msra.mxu0 0.0
    %196 = vmatprep.subr.mxu0 0.0
    %197 = vmatpush2.msra.mxu0 0.0
    %198 = vmatprep.subr.mxu0 0.0
    %199 = vmatpush2.msra.mxu0 0.0
    %200 = vmatprep.subr.mxu0 0.0
    %201 = vmatpush2.msra.mxu0 0.0
    %202 = vmatprep.mubr.f32.mxu0 0.0
    %203 = vmatmul.mubr.f32.gmra.mxu0 %v114
    %v204 = vpop.f32.mrf.mxu0
    %v205 = vadd.f32 %v136, %v204
    %v206 = vpop.f32.mrf.mxu0
    %207 = vdwg.mxu0
    %v208 = vtanh.pop %v205
    %v209 = vld [vmem:[%s5] sm:$0xff]
    %v210 = vld [vmem:[%s5 + $0x8] sm:$0xff]
    %v211 = vld [vmem:[%s5 + $0x10] sm:$0xff]
    %v212 = vld [vmem:[%s5 + $0x18] sm:$0xff]
    %v213 = vld [vmem:[%s5 + $0x20] sm:$0xff]
    %v214 = vld [vmem:[%s5 + $0x28] sm:$0xff]
    %v215 = vld [vmem:[%s5 + $0x30] sm:$0xff]
    %v216 = vld [vmem:[%s5 + $0x38] sm:$0xff]
    %v217 = vld [vmem:[%s5 + $0x40] sm:$0xff]
    %v218 = vld [vmem:[%s5 + $0x48] sm:$0xff]
    %v219 = vld [vmem:[%s5 + $0x50] sm:$0xff]
    %v220 = vld [vmem:[%s5 + $0x58] sm:$0xff]
    %v221 = vld [vmem:[%s5 + $0x60] sm:$0xff]
    %v222 = vld [vmem:[%s5 + $0x68] sm:$0xff]
    %v223 = vld [vmem:[%s5 + $0x70] sm:$0xff]
    %v224 = vld [vmem:[%s5 + $0x78] sm:$0xff]
    %v225 = vld [vmem:[%s6] sm:$0x1]
    %v227 = vlaneseq
    %v228 = vshrl.u32 %v227, 7
    %v229 = vsub.s32 0, %v228
    %v230 = vrot.slane %v225, %v229
    %232 = vmatprep.subr.mxu0 0.0
    %233 = vmatpush1.msra.mxu0 %v224
    %234 = vmatprep.subr.mxu0 0.0
    %235 = vmatpush1.msra.mxu0 %v223
    %236 = vmatprep.subr.mxu0 0.0
    %237 = vmatpush1.msra.mxu0 %v222
    %238 = vmatprep.subr.mxu0 0.0
    %239 = vmatpush1.msra.mxu0 %v221
    %240 = vmatprep.subr.mxu0 0.0
    %241 = vmatpush1.msra.mxu0 %v220
    %242 = vmatprep.subr.mxu0 0.0
    %243 = vmatpush1.msra.mxu0 %v219
    %244 = vmatprep.subr.mxu0 0.0
    %245 = vmatpush1.msra.mxu0 %v218
    %246 = vmatprep.subr.mxu0 0.0
    %247 = vmatpush1.msra.mxu0 %v217
    %248 = vmatprep.subr.mxu0 0.0
    %249 = vmatpush1.msra.mxu0 %v216
    %250 = vmatprep.subr.mxu0 0.0
    %251 = vmatpush1.msra.mxu0 %v215
    %252 = vmatprep.subr.mxu0 0.0
    %253 = vmatpush1.msra.mxu0 %v214
    %254 = vmatprep.subr.mxu0 0.0
    %255 = vmatpush1.msra.mxu0 %v213
    %256 = vmatprep.subr.mxu0 0.0
    %257 = vmatpush1.msra.mxu0 %v212
    %258 = vmatprep.subr.mxu0 0.0
    %259 = vmatpush1.msra.mxu0 %v211
    %260 = vmatprep.subr.mxu0 0.0
    %261 = vmatpush1.msra.mxu0 %v210
    %262 = vmatprep.subr.mxu0 0.0
    %263 = vmatpush1.msra.mxu0 %v209
    %264 = vmatprep.subr.mxu0 0.0
    %265 = vmatpush2.msra.mxu0 0.0
    %266 = vmatprep.subr.mxu0 0.0
    %267 = vmatpush2.msra.mxu0 0.0
    %268 = vmatprep.subr.mxu0 0.0
    %269 = vmatpush2.msra.mxu0 0.0
    %270 = vmatprep.subr.mxu0 0.0
    %271 = vmatpush2.msra.mxu0 0.0
    %272 = vmatprep.subr.mxu0 0.0
    %273 = vmatpush2.msra.mxu0 0.0
    %274 = vmatprep.subr.mxu0 0.0
    %275 = vmatpush2.msra.mxu0 0.0
    %276 = vmatprep.subr.mxu0 0.0
    %277 = vmatpush2.msra.mxu0 0.0
    %278 = vmatprep.subr.mxu0 0.0
    %279 = vmatpush2.msra.mxu0 0.0
    %280 = vmatprep.subr.mxu0 0.0
    %281 = vmatpush2.msra.mxu0 0.0
    %282 = vmatprep.subr.mxu0 0.0
    %283 = vmatpush2.msra.mxu0 0.0
    %284 = vmatprep.subr.mxu0 0.0
    %285 = vmatpush2.msra.mxu0 0.0
    %286 = vmatprep.subr.mxu0 0.0
    %287 = vmatpush2.msra.mxu0 0.0
    %288 = vmatprep.subr.mxu0 0.0
    %289 = vmatpush2.msra.mxu0 0.0
    %290 = vmatprep.subr.mxu0 0.0
    %291 = vmatpush2.msra.mxu0 0.0
    %292 = vmatprep.subr.mxu0 0.0
    %293 = vmatpush2.msra.mxu0 0.0
    %294 = vmatprep.subr.mxu0 0.0
    %295 = vmatpush2.msra.mxu0 0.0
    %296 = vmatprep.mubr.f32.mxu0 0.0
    %297 = vmatmul.mubr.f32.gmra.mxu0 %v208
    %v298 = vpop.f32.mrf.mxu0
    %v299 = vadd.f32 %v230, %v298
    %v300 = vpop.f32.mrf.mxu0
    %301 = vdwg.mxu0
    %vm302 = vcmask 48128
    %v303 = vsel %vm302, %v299, -inf
    %304 = vmax.xlane.f32.xlu0 %v303
    %v305 = vpop.xlane.xlu0 %304
    %v306 = vsub.f32 %v299, %v305
    %v307 = vmul.f32 %v306, 1.442695
    %v308 = vpow.pop %v307
    %v309 = vsel %vm302, %v308, 0.0
    %310 = vadd.xlane.f32.xlu0 %v309
    %v311 = vpop.xlane.xlu0 %310
    %v312 = vrcp.pop %v311
    %v313 = vmul.f32 %v308, %v312
    %314 = vst.msk [vmem:[#allocation2] sm:$0xff] %vm302, %v313
    // Predicated region
    $region30: #{tpu_custom_call.1} parent=1 // pred_check
      _
    $region31: #{tpu_custom_call.1} parent=1 // pred_check_branch
      %316 = sbr.rel (0) target = $region33
    $region32: #{tpu_custom_call.1} parent=1 // pred_region
      %s318 = ssub.s32 128, 128
      %319 = vsyncadd [#allocation3], %s318
      %s321 = sshll.u32 [#allocation2], 4
      %s322 = int_to_ptr.vmem [resolvable:$true] %s321
      %324 = dma.vmem_to_hbm [thread:$0]  %s322, 128, %s7, [#allocation3]
    $region33: #{tpu_custom_call.1} parent=1 // pred_fallthru
      _
    // Predicated region
    $region34: #{tpu_custom_call.1} parent=1 // pred_check
      _
    $region35: #{tpu_custom_call.1} parent=1 // pred_check_branch
      %326 = sbr.rel (0) target = $region37
    $region36: #{tpu_custom_call.1} parent=1 // pred_region
      %327 = dma.done [#allocation3], 128
    $region37: #{tpu_custom_call.1} parent=1 // pred_fallthru
      _
    %328 = vsyncpa [#allocation3], 1

// kernel: tpu_custom_call.1
$region0: #{tpu_custom_call.1}
  #allocation0 [shape = 'u32[]', space=smem, size = 0x4, offset = 0x4, fixed_abs, tag = 'smem constant byte address 0x4 - core index']
  #allocation1 [shape = 'u32[144,128]{1,0:T(1,128)}', space=vmem, size = 0x12000, scoped, tag = 'internal scratch']
  %s0 = inlined_call_operand.vmem [shape: f32[8,4], index: 0, kind: input, shape index: {}]
  %s1 = inlined_call_operand.vmem [shape: f32[4,128], index: 1, kind: input, shape index: {}]
  %s2 = inlined_call_operand.vmem [shape: f32[1,128], index: 2, kind: input, shape index: {}]
  %s3 = inlined_call_operand.vmem [shape: f32[128,128], index: 3, kind: input, shape index: {}]
  %s4 = inlined_call_operand.vmem [shape: f32[1,128], index: 4, kind: input, shape index: {}]
  %s5 = inlined_call_operand.vmem [shape: f32[128,6], index: 5, kind: input, shape index: {}]
  %s6 = inlined_call_operand.vmem [shape: f32[1,6], index: 6, kind: input, shape index: {}]
  %s7 = inlined_call_operand.hbm [shape: f32[8,6], index: 7, kind: output, shape index: {}]
  %s8 = sld [smem:[#allocation0]]
  $region38: #{tpu_custom_call.1} parent=0
    _
  %s10 = ssub.s32 1, %s8
  %s11 = scalar_select 0, %s10, %s8
  $region1: #{tpu_custom_call.1} parent=0
    #allocation2 [shape = 'u8[4096]{0}', space=vmem, size = 0x1000, scoped, tag = 'output window, operand 0, single buffered']
    #allocation3 [shape = 's32[1]{0}', space=sflag, size = 0x4, scoped, tag = 'scoped memory for tpu_custom_call.1']
    %12 = vsyncpa [#allocation3], 0
    // Predicated region
    $region2: #{tpu_custom_call.1} parent=1 // pred_check
      _
    $region3: #{tpu_custom_call.1} parent=1 // pred_check_branch
      %14 = sbr.rel (0) target = $region5
    $region4: #{tpu_custom_call.1} parent=1 // pred_region
      _
    $region5: #{tpu_custom_call.1} parent=1 // pred_fallthru
      _
    // Predicated region
    $region6: #{tpu_custom_call.1} parent=1 // pred_check
      _
    $region7: #{tpu_custom_call.1} parent=1 // pred_check_branch
      %16 = sbr.rel (0) target = $region9
    $region8: #{tpu_custom_call.1} parent=1 // pred_region
      _
    $region9: #{tpu_custom_call.1} parent=1 // pred_fallthru
      _
    // Predicated region
    $region10: #{tpu_custom_call.1} parent=1 // pred_check
      _
    $region11: #{tpu_custom_call.1} parent=1 // pred_check_branch
      %18 = sbr.rel (0) target = $region13
    $region12: #{tpu_custom_call.1} parent=1 // pred_region
      _
    $region13: #{tpu_custom_call.1} parent=1 // pred_fallthru
      _
    // Predicated region
    $region14: #{tpu_custom_call.1} parent=1 // pred_check
      _
    $region15: #{tpu_custom_call.1} parent=1 // pred_check_branch
      %20 = sbr.rel (0) target = $region17
    $region16: #{tpu_custom_call.1} parent=1 // pred_region
      _
    $region17: #{tpu_custom_call.1} parent=1 // pred_fallthru
      _
    // Predicated region
    $region18: #{tpu_custom_call.1} parent=1 // pred_check
      _
    $region19: #{tpu_custom_call.1} parent=1 // pred_check_branch
      %22 = sbr.rel (0) target = $region21
    $region20: #{tpu_custom_call.1} parent=1 // pred_region
      _
    $region21: #{tpu_custom_call.1} parent=1 // pred_fallthru
      _
    // Predicated region
    $region22: #{tpu_custom_call.1} parent=1 // pred_check
      _
    $region23: #{tpu_custom_call.1} parent=1 // pred_check_branch
      %24 = sbr.rel (0) target = $region25
    $region24: #{tpu_custom_call.1} parent=1 // pred_region
      _
    $region25: #{tpu_custom_call.1} parent=1 // pred_fallthru
      _
    // Predicated region
    $region26: #{tpu_custom_call.1} parent=1 // pred_check
      _
    $region27: #{tpu_custom_call.1} parent=1 // pred_check_branch
      %26 = sbr.rel (0) target = $region29
    $region28: #{tpu_custom_call.1} parent=1 // pred_region
      _
    $region29: #{tpu_custom_call.1} parent=1 // pred_fallthru
      _
    %v27 = vld [vmem:[%s0] sm:$0xff]
    %v28 = vld [vmem:[%s1] sm:$0xf]
    %v29 = vld [vmem:[%s2] sm:$0x1]
    %v31 = vlaneseq
    %v32 = vshrl.u32 %v31, 7
    %v33 = vsub.s32 0, %v32
    %v34 = vrot.slane %v29, %v33
    %vm36 = vcmask 31744
    %v38 = vsel %vm36, %v27, 0
    %vm40 = vcmask 1043456
    %v42 = vsel %vm40, %v28, 0
    %44 = vmatprep.subr.mxu0 0.0
    %45 = vmatpush1.msra.mxu0 0.0
    %46 = vmatprep.subr.mxu0 0.0
    %47 = vmatpush1.msra.mxu0 0.0
    %48 = vmatprep.subr.mxu0 0.0
    %49 = vmatpush1.msra.mxu0 0.0
    %50 = vmatprep.subr.mxu0 0.0
    %51 = vmatpush1.msra.mxu0 0.0
    %52 = vmatprep.subr.mxu0 0.0
    %53 = vmatpush1.msra.mxu0 0.0
    %54 = vmatprep.subr.mxu0 0.0
    %55 = vmatpush1.msra.mxu0 0.0
    %56 = vmatprep.subr.mxu0 0.0
    %57 = vmatpush1.msra.mxu0 0.0
    %58 = vmatprep.subr.mxu0 0.0
    %59 = vmatpush1.msra.mxu0 0.0
    %60 = vmatprep.subr.mxu0 0.0
    %61 = vmatpush1.msra.mxu0 0.0
    %62 = vmatprep.subr.mxu0 0.0
    %63 = vmatpush1.msra.mxu0 0.0
    %64 = vmatprep.subr.mxu0 0.0
    %65 = vmatpush1.msra.mxu0 0.0
    %66 = vmatprep.subr.mxu0 0.0
    %67 = vmatpush1.msra.mxu0 0.0
    %68 = vmatprep.subr.mxu0 0.0
    %69 = vmatpush1.msra.mxu0 0.0
    %70 = vmatprep.subr.mxu0 0.0
    %71 = vmatpush1.msra.mxu0 0.0
    %72 = vmatprep.subr.mxu0 0.0
    %73 = vmatpush1.msra.mxu0 0.0
    %74 = vmatprep.subr.mxu0 0.0
    %75 = vmatpush1.msra.mxu0 %v42
    %76 = vmatprep.subr.mxu0 0.0
    %77 = vmatpush2.msra.mxu0 0.0
    %78 = vmatprep.subr.mxu0 0.0
    %79 = vmatpush2.msra.mxu0 0.0
    %80 = vmatprep.subr.mxu0 0.0
    %81 = vmatpush2.msra.mxu0 0.0
    %82 = vmatprep.subr.mxu0 0.0
    %83 = vmatpush2.msra.mxu0 0.0
    %84 = vmatprep.subr.mxu0 0.0
    %85 = vmatpush2.msra.mxu0 0.0
    %86 = vmatprep.subr.mxu0 0.0
    %87 = vmatpush2.msra.mxu0 0.0
    %88 = vmatprep.subr.mxu0 0.0
    %89 = vmatpush2.msra.mxu0 0.0
    %90 = vmatprep.subr.mxu0 0.0
    %91 = vmatpush2.msra.mxu0 0.0
    %92 = vmatprep.subr.mxu0 0.0
    %93 = vmatpush2.msra.mxu0 0.0
    %94 = vmatprep.subr.mxu0 0.0
    %95 = vmatpush2.msra.mxu0 0.0
    %96 = vmatprep.subr.mxu0 0.0
    %97 = vmatpush2.msra.mxu0 0.0
    %98 = vmatprep.subr.mxu0 0.0
    %99 = vmatpush2.msra.mxu0 0.0
    %100 = vmatprep.subr.mxu0 0.0
    %101 = vmatpush2.msra.mxu0 0.0
    %102 = vmatprep.subr.mxu0 0.0
    %103 = vmatpush2.msra.mxu0 0.0
    %104 = vmatprep.subr.mxu0 0.0
    %105 = vmatpush2.msra.mxu0 0.0
    %106 = vmatprep.subr.mxu0 0.0
    %107 = vmatpush2.msra.mxu0 0.0
    %108 = vmatprep.mubr.f32.mxu0 0.0
    %109 = vmatmul.mubr.f32.gmra.mxu0 %v38
    %v110 = vpop.f32.mrf.mxu0
    %v111 = vadd.f32 %v34, %v110
    %v112 = vpop.f32.mrf.mxu0
    %113 = vdwg.mxu0
    %v114 = vtanh.pop %v111
    %v115 = vld [vmem:[%s3] sm:$0xff]
    %v116 = vld [vmem:[%s3 + $0x8] sm:$0xff]
    %v117 = vld [vmem:[%s3 + $0x10] sm:$0xff]
    %v118 = vld [vmem:[%s3 + $0x18] sm:$0xff]
    %v119 = vld [vmem:[%s3 + $0x20] sm:$0xff]
    %v120 = vld [vmem:[%s3 + $0x28] sm:$0xff]
    %v121 = vld [vmem:[%s3 + $0x30] sm:$0xff]
    %v122 = vld [vmem:[%s3 + $0x38] sm:$0xff]
    %v123 = vld [vmem:[%s3 + $0x40] sm:$0xff]
    %v124 = vld [vmem:[%s3 + $0x48] sm:$0xff]
    %v125 = vld [vmem:[%s3 + $0x50] sm:$0xff]
    %v126 = vld [vmem:[%s3 + $0x58] sm:$0xff]
    %v127 = vld [vmem:[%s3 + $0x60] sm:$0xff]
    %v128 = vld [vmem:[%s3 + $0x68] sm:$0xff]
    %v129 = vld [vmem:[%s3 + $0x70] sm:$0xff]
    %v130 = vld [vmem:[%s3 + $0x78] sm:$0xff]
    %v131 = vld [vmem:[%s4] sm:$0x1]
    %v133 = vlaneseq
    %v134 = vshrl.u32 %v133, 7
    %v135 = vsub.s32 0, %v134
    %v136 = vrot.slane %v131, %v135
    %138 = vmatprep.subr.mxu0 0.0
    %139 = vmatpush1.msra.mxu0 %v130
    %140 = vmatprep.subr.mxu0 0.0
    %141 = vmatpush1.msra.mxu0 %v129
    %142 = vmatprep.subr.mxu0 0.0
    %143 = vmatpush1.msra.mxu0 %v128
    %144 = vmatprep.subr.mxu0 0.0
    %145 = vmatpush1.msra.mxu0 %v127
    %146 = vmatprep.subr.mxu0 0.0
    %147 = vmatpush1.msra.mxu0 %v126
    %148 = vmatprep.subr.mxu0 0.0
    %149 = vmatpush1.msra.mxu0 %v125
    %150 = vmatprep.subr.mxu0 0.0
    %151 = vmatpush1.msra.mxu0 %v124
    %152 = vmatprep.subr.mxu0 0.0
    %153 = vmatpush1.msra.mxu0 %v123
    %154 = vmatprep.subr.mxu0 0.0
    %155 = vmatpush1.msra.mxu0 %v122
    %156 = vmatprep.subr.mxu0 0.0
    %157 = vmatpush1.msra.mxu0 %v121
    %158 = vmatprep.subr.mxu0 0.0
    %159 = vmatpush1.msra.mxu0 %v120
    %160 = vmatprep.subr.mxu0 0.0
    %161 = vmatpush1.msra.mxu0 %v119
    %162 = vmatprep.subr.mxu0 0.0
    %163 = vmatpush1.msra.mxu0 %v118
    %164 = vmatprep.subr.mxu0 0.0
    %165 = vmatpush1.msra.mxu0 %v117
    %166 = vmatprep.subr.mxu0 0.0
    %167 = vmatpush1.msra.mxu0 %v116
    %168 = vmatprep.subr.mxu0 0.0
    %169 = vmatpush1.msra.mxu0 %v115
    %170 = vmatprep.subr.mxu0 0.0
    %171 = vmatpush2.msra.mxu0 0.0
    %172 = vmatprep.subr.mxu0 0.0
    %173 = vmatpush2.msra.mxu0 0.0
    %174 = vmatprep.subr.mxu0 0.0
    %175 = vmatpush2.msra.mxu0 0.0
    %176 = vmatprep.subr.mxu0 0.0
    %177 = vmatpush2.msra.mxu0 0.0
    %178 = vmatprep.subr.mxu0 0.0
    %179 = vmatpush2.msra.mxu0 0.0
    %180 = vmatprep.subr.mxu0 0.0
    %181 = vmatpush2.msra.mxu0 0.0
    %182 = vmatprep.subr.mxu0 0.0
    %183 = vmatpush2.msra.mxu0 0.0
    %184 = vmatprep.subr.mxu0 0.0
    %185 = vmatpush2.msra.mxu0 0.0
    %186 = vmatprep.subr.mxu0 0.0
    %187 = vmatpush2.msra.mxu0 0.0
    %188 = vmatprep.subr.mxu0 0.0
    %189 = vmatpush2.msra.mxu0 0.0
    %190 = vmatprep.subr.mxu0 0.0
    %191 = vmatpush2.msra.mxu0 0.0
    %192 = vmatprep.subr.mxu0 0.0
    %193 = vmatpush2.msra.mxu0 0.0
    %194 = vmatprep.subr.mxu0 0.0
    %195 = vmatpush2.msra.mxu0 0.0
    %196 = vmatprep.subr.mxu0 0.0
    %197 = vmatpush2.msra.mxu0 0.0
    %198 = vmatprep.subr.mxu0 0.0
    %199 = vmatpush2.msra.mxu0 0.0
    %200 = vmatprep.subr.mxu0 0.0
    %201 = vmatpush2.msra.mxu0 0.0
    %202 = vmatprep.mubr.f32.mxu0 0.0
    %203 = vmatmul.mubr.f32.gmra.mxu0 %v114
    %v204 = vpop.f32.mrf.mxu0
    %v205 = vadd.f32 %v136, %v204
    %v206 = vpop.f32.mrf.mxu0
    %207 = vdwg.mxu0
    %v208 = vtanh.pop %v205
    %v209 = vld [vmem:[%s5] sm:$0xff]
    %v210 = vld [vmem:[%s5 + $0x8] sm:$0xff]
    %v211 = vld [vmem:[%s5 + $0x10] sm:$0xff]
    %v212 = vld [vmem:[%s5 + $0x18] sm:$0xff]
    %v213 = vld [vmem:[%s5 + $0x20] sm:$0xff]
    %v214 = vld [vmem:[%s5 + $0x28] sm:$0xff]
    %v215 = vld [vmem:[%s5 + $0x30] sm:$0xff]
    %v216 = vld [vmem:[%s5 + $0x38] sm:$0xff]
    %v217 = vld [vmem:[%s5 + $0x40] sm:$0xff]
    %v218 = vld [vmem:[%s5 + $0x48] sm:$0xff]
    %v219 = vld [vmem:[%s5 + $0x50] sm:$0xff]
    %v220 = vld [vmem:[%s5 + $0x58] sm:$0xff]
    %v221 = vld [vmem:[%s5 + $0x60] sm:$0xff]
    %v222 = vld [vmem:[%s5 + $0x68] sm:$0xff]
    %v223 = vld [vmem:[%s5 + $0x70] sm:$0xff]
    %v224 = vld [vmem:[%s5 + $0x78] sm:$0xff]
    %v225 = vld [vmem:[%s6] sm:$0x1]
    %v227 = vlaneseq
    %v228 = vshrl.u32 %v227, 7
    %v229 = vsub.s32 0, %v228
    %v230 = vrot.slane %v225, %v229
    %232 = vmatprep.subr.mxu0 0.0
    %233 = vmatpush1.msra.mxu0 %v224
    %234 = vmatprep.subr.mxu0 0.0
    %235 = vmatpush1.msra.mxu0 %v223
    %236 = vmatprep.subr.mxu0 0.0
    %237 = vmatpush1.msra.mxu0 %v222
    %238 = vmatprep.subr.mxu0 0.0
    %239 = vmatpush1.msra.mxu0 %v221
    %240 = vmatprep.subr.mxu0 0.0
    %241 = vmatpush1.msra.mxu0 %v220
    %242 = vmatprep.subr.mxu0 0.0
    %243 = vmatpush1.msra.mxu0 %v219
    %244 = vmatprep.subr.mxu0 0.0
    %245 = vmatpush1.msra.mxu0 %v218
    %246 = vmatprep.subr.mxu0 0.0
    %247 = vmatpush1.msra.mxu0 %v217
    %248 = vmatprep.subr.mxu0 0.0
    %249 = vmatpush1.msra.mxu0 %v216
    %250 = vmatprep.subr.mxu0 0.0
    %251 = vmatpush1.msra.mxu0 %v215
    %252 = vmatprep.subr.mxu0 0.0
    %253 = vmatpush1.msra.mxu0 %v214
    %254 = vmatprep.subr.mxu0 0.0
    %255 = vmatpush1.msra.mxu0 %v213
    %256 = vmatprep.subr.mxu0 0.0
    %257 = vmatpush1.msra.mxu0 %v212
    %258 = vmatprep.subr.mxu0 0.0
    %259 = vmatpush1.msra.mxu0 %v211
    %260 = vmatprep.subr.mxu0 0.0
    %261 = vmatpush1.msra.mxu0 %v210
    %262 = vmatprep.subr.mxu0 0.0
    %263 = vmatpush1.msra.mxu0 %v209
    %264 = vmatprep.subr.mxu0 0.0
    %265 = vmatpush2.msra.mxu0 0.0
    %266 = vmatprep.subr.mxu0 0.0
    %267 = vmatpush2.msra.mxu0 0.0
    %268 = vmatprep.subr.mxu0 0.0
    %269 = vmatpush2.msra.mxu0 0.0
    %270 = vmatprep.subr.mxu0 0.0
    %271 = vmatpush2.msra.mxu0 0.0
    %272 = vmatprep.subr.mxu0 0.0
    %273 = vmatpush2.msra.mxu0 0.0
    %274 = vmatprep.subr.mxu0 0.0
    %275 = vmatpush2.msra.mxu0 0.0
    %276 = vmatprep.subr.mxu0 0.0
    %277 = vmatpush2.msra.mxu0 0.0
    %278 = vmatprep.subr.mxu0 0.0
    %279 = vmatpush2.msra.mxu0 0.0
    %280 = vmatprep.subr.mxu0 0.0
    %281 = vmatpush2.msra.mxu0 0.0
    %282 = vmatprep.subr.mxu0 0.0
    %283 = vmatpush2.msra.mxu0 0.0
    %284 = vmatprep.subr.mxu0 0.0
    %285 = vmatpush2.msra.mxu0 0.0
    %286 = vmatprep.subr.mxu0 0.0
    %287 = vmatpush2.msra.mxu0 0.0
    %288 = vmatprep.subr.mxu0 0.0
    %289 = vmatpush2.msra.mxu0 0.0
    %290 = vmatprep.subr.mxu0 0.0
    %291 = vmatpush2.msra.mxu0 0.0
    %292 = vmatprep.subr.mxu0 0.0
    %293 = vmatpush2.msra.mxu0 0.0
    %294 = vmatprep.subr.mxu0 0.0
    %295 = vmatpush2.msra.mxu0 0.0
    %296 = vmatprep.mubr.f32.mxu0 0.0
    %297 = vmatmul.mubr.f32.gmra.mxu0 %v208
    %v298 = vpop.f32.mrf.mxu0
    %v299 = vadd.f32 %v230, %v298
    %v300 = vpop.f32.mrf.mxu0
    %301 = vdwg.mxu0
    %vm302 = vcmask 48128
    %v303 = vsel %vm302, %v299, -inf
    %304 = vmax.xlane.f32.xlu0 %v303
    %v305 = vpop.xlane.xlu0 %304
    %v306 = vsub.f32 %v299, %v305
    %v307 = vmul.f32 %v306, 1.442695
    %v308 = vpow.pop %v307
    %v309 = vsel %vm302, %v308, 0.0
    %310 = vadd.xlane.f32.xlu0 %v309
    %v311 = vpop.xlane.xlu0 %310
    %v312 = vrcp.pop %v311
    %v313 = vmul.f32 %v308, %v312
    %314 = vst.msk [vmem:[#allocation2] sm:$0xff] %vm302, %v313
    // Predicated region
    $region30: #{tpu_custom_call.1} parent=1 // pred_check
      _
    $region31: #{tpu_custom_call.1} parent=1 // pred_check_branch
      %316 = sbr.rel (0) target = $region33
    $region32: #{tpu_custom_call.1} parent=1 // pred_region
      %s318 = ssub.s32 128, 128
      %319 = vsyncadd [#allocation3], %s318
      %s321 = sshll.u32 [#allocation2], 4
      %s322 = int_to_ptr.vmem [resolvable:$true] %s321
      %324 = dma.vmem_to_hbm [thread:$0]  %s322, 128, %s7, [#allocation3]
    $region33: #{tpu_custom_call.1} parent=1 // pred_fallthru
      _
    // Predicated region
    $region34: #{tpu_custom_call.1} parent=1 // pred_check
      _
    $region35: #{tpu_custom_call.1} parent=1 // pred_check_branch
      %326 = sbr.rel (0) target = $region37
    $region36: #{tpu_custom_call.1} parent=1 // pred_region
      %327 = dma.done [#allocation3], 128
    $region37: #{tpu_custom_call.1} parent=1 // pred_fallthru
      _
    %328 = vsyncpa [#allocation3], 1

</llo_original>
